<compile_context>
chip_gen: v7x
topology: tpu7x:2x2x1
jax: 0.10.0
libtpu: 0.0.40
codegen_flags: <defaults>
</compile_context>

<pallas_src>
import jax
import jax.numpy as jnp
from jax.experimental import pallas as pl
from jax.experimental.pallas import tpu as pltpu

IN_DIM = 9 * 4        # 36 logical input features
EMBED_N = 128         # hidden width
OUT_DIM = 9           # logical output features
OUT_PAD = 128         # lane-dense padded N for unmasked stores
TM_MAX = 512          # batch tile (rows) for large batches


def tictactoe_kernel(x_ref, w1_ref, b1_ref, w2_ref, o_ref):
    # fc1: (TM, 36)bf16 @ (36, 128)bf16 -> f32 accumulate on the MXU.
    h = jnp.dot(x_ref[...], w1_ref[...], preferred_element_type=jnp.float32)
    # Bias add + ReLU in f32 on the VPU (b1 broadcast (1,128) over rows).
    h = jnp.maximum(h + b1_ref[...], 0.0)
    # fc2 (no bias): (TM, 128)bf16 @ (128, 128)bf16 -> f32, lane-dense store.
    o_ref[...] = jnp.dot(h.astype(jnp.bfloat16), w2_ref[...],
                         preferred_element_type=jnp.float32)


def _round_up(n, m):
    return -(-n // m) * m


def tictactoe_forward(x, w1, b1, w2):
    """x: (B, 36) f32; w1: (36, 128); b1: (1, 128); w2: (128, 9) -> (B, 9) f32.

    Weights are stored transposed vs. PyTorch (in, out), so the kernel computes
    relu(x @ W1 + b1) @ W2, matching PyTorch's x @ W1.T + b1 then h @ W2.T.
    """
    B = x.shape[0]
    # Batch tile: 512 rows for large batches; round small batches up to a
    # sublane multiple (8) so the block stays (8,*)-aligned.
    tm = TM_MAX if B >= TM_MAX else max(8, _round_up(B, 8))
    b_pad = _round_up(B, tm)
    grid = (b_pad // tm,)

    # bf16 operands; only the batch axis of x is padded (rows of zeros).
    xb = x.astype(jnp.bfloat16)
    if b_pad != B:
        xb = jnp.pad(xb, ((0, b_pad - B), (0, 0)))
    w1b = w1.astype(jnp.bfloat16)
    # Zero-pad fc2's output dim 9 -> 128 (exact: padded cols contribute 0).
    w2p = jnp.zeros((EMBED_N, OUT_PAD), jnp.bfloat16)
    w2p = w2p.at[:, :OUT_DIM].set(w2.astype(jnp.bfloat16))
    b1f = b1.reshape(1, EMBED_N).astype(jnp.float32)

    out = pl.pallas_call(
        tictactoe_kernel,
        out_shape=jax.ShapeDtypeStruct((b_pad, OUT_PAD), jnp.float32),
        grid=grid,
        in_specs=[
            # x streams per batch tile; weights/bias stay resident (const idx).
            pl.BlockSpec((tm, IN_DIM), lambda i: (i, 0)),
            pl.BlockSpec((IN_DIM, EMBED_N), lambda i: (0, 0)),
            pl.BlockSpec((1, EMBED_N), lambda i: (0, 0)),
            pl.BlockSpec((EMBED_N, OUT_PAD), lambda i: (0, 0)),
        ],
        out_specs=pl.BlockSpec((tm, OUT_PAD), lambda i: (i, 0)),
        compiler_params=pltpu.CompilerParams(
            dimension_semantics=("parallel",),
        ),
    )(xb, w1b, b1f, w2p)

    return out[:B, :OUT_DIM]


def init_params(key):
    """Deterministic init matching PyTorch Linear shapes (stored transposed)."""
    k1, k2, k3 = jax.random.split(key, 3)
    lim1 = 1.0 / jnp.sqrt(jnp.float32(IN_DIM))
    lim2 = 1.0 / jnp.sqrt(jnp.float32(EMBED_N))
    w1 = jax.random.uniform(k1, (IN_DIM, EMBED_N), jnp.float32, -lim1, lim1)
    b1 = jax.random.uniform(k2, (1, EMBED_N), jnp.float32, -lim1, lim1)
    w2 = jax.random.uniform(k3, (EMBED_N, OUT_DIM), jnp.float32, -lim2, lim2)
    return w1, b1, w2


def reference_forward(x, w1, b1, w2):
    """Reference with the same bf16-operand / f32-accumulate numerics."""
    xb = x.astype(jnp.bfloat16)
    w1b = w1.astype(jnp.bfloat16)
    w2b = w2.astype(jnp.bfloat16)
    h = jnp.dot(xb, w1b, preferred_element_type=jnp.float32) + b1
    h = jnp.maximum(h, 0.0)
    return jnp.dot(h.astype(jnp.bfloat16), w2b,
                   preferred_element_type=jnp.float32)


if __name__ == "__main__":
    key = jax.random.PRNGKey(0)
    kx, kp = jax.random.split(key)
    w1, b1, w2 = init_params(kp)

    # Small demo batches; wrapper tiles at TM=512 for large batches.
    for B in (8, 5):   # aligned and unaligned batch sizes
        # Inputs in {0, 1} like one-hot board encodings (9 cells x 4 features).
        x = jax.random.bernoulli(kx, 0.3, (B, IN_DIM)).astype(jnp.float32)

        out = tictactoe_forward(x, w1, b1, w2)
        out = jax.block_until_ready(out)

        ref = reference_forward(x, w1, b1, w2)
        assert out.shape == (B, OUT_DIM), out.shape
        assert jnp.allclose(out, ref, atol=1e-2, rtol=1e-2), \
            f"mismatch vs reference at B={B}"

    print("KERNEL_OK")
</pallas_src>

<mosaic_0001>
module attributes {stable_mosaic.version = 11 : i64} {
  func.func @tictactoe_kernel(%arg0: i32, %arg1: memref<8x36xbf16, #tpu.memory_space<vmem>>, %arg2: memref<36x128xbf16, #tpu.memory_space<vmem>>, %arg3: memref<1x128xf32, #tpu.memory_space<vmem>>, %arg4: memref<128x128xbf16, #tpu.memory_space<vmem>>, %arg5: memref<8x128xf32, #tpu.memory_space<vmem>>) attributes {dimension_semantics = [#tpu.dimension_semantics<parallel>], iteration_bounds = array<i64: 1>, scalar_prefetch = 0 : i64, scratch_operands = 0 : i64, tpu.core_type = #tpu.core_type<tc>, window_params = [{transform_indices = @transform_0, window_bounds = array<i64: 8, 36>}, {pipeline_mode = #tpu.pipeline_mode<synchronous>, transform_indices = @transform_1, window_bounds = array<i64: 36, 128>}, {pipeline_mode = #tpu.pipeline_mode<synchronous>, transform_indices = @transform_2, window_bounds = array<i64: 1, 128>}, {pipeline_mode = #tpu.pipeline_mode<synchronous>, transform_indices = @transform_3, window_bounds = array<i64: 128, 128>}, {transform_indices = @transform_4, window_bounds = array<i64: 8, 128>}]} {
    %c0 = arith.constant 0 : index
    %c0_0 = arith.constant 0 : index
    %0 = vector.load %arg1[%c0, %c0_0] : memref<8x36xbf16, #tpu.memory_space<vmem>>, vector<8x36xbf16>
    %c0_1 = arith.constant 0 : index
    %c0_2 = arith.constant 0 : index
    %1 = vector.load %arg2[%c0_1, %c0_2] : memref<36x128xbf16, #tpu.memory_space<vmem>>, vector<36x128xbf16>
    %cst = arith.constant dense<0.000000e+00> : vector<8x128xf32>
    %2 = tpu.matmul %0, %1, %cst {dimension_numbers = #tpu.dot_dimension_numbers<[1], [0], [0], [1], [0, 0, 1, 1], [], []>} : vector<8x36xbf16>, vector<36x128xbf16>, vector<8x128xf32> -> vector<8x128xf32>
    %c0_3 = arith.constant 0 : index
    %c0_4 = arith.constant 0 : index
    %3 = vector.load %arg3[%c0_3, %c0_4] : memref<1x128xf32, #tpu.memory_space<vmem>>, vector<1x128xf32>
    %4 = vector.broadcast %3 : vector<1x128xf32> to vector<8x128xf32>
    %5 = arith.addf %2, %4 : vector<8x128xf32>
    %cst_5 = arith.constant 0.000000e+00 : f32
    %6 = vector.broadcast %cst_5 : f32 to vector<8x128xf32>
    %7 = arith.maximumf %5, %6 : vector<8x128xf32>
    %8 = arith.truncf %7 : vector<8x128xf32> to vector<8x128xbf16>
    %c0_6 = arith.constant 0 : index
    %c0_7 = arith.constant 0 : index
    %9 = vector.load %arg4[%c0_6, %c0_7] : memref<128x128xbf16, #tpu.memory_space<vmem>>, vector<128x128xbf16>
    %cst_8 = arith.constant dense<0.000000e+00> : vector<8x128xf32>
    %10 = tpu.matmul %8, %9, %cst_8 {dimension_numbers = #tpu.dot_dimension_numbers<[1], [0], [0], [1], [0, 0, 1, 1], [], []>} : vector<8x128xbf16>, vector<128x128xbf16>, vector<8x128xf32> -> vector<8x128xf32>
    %c0_9 = arith.constant 0 : index
    %c0_10 = arith.constant 0 : index
    %11 = vector.load %arg5[%c0_9, %c0_10] : memref<8x128xf32, #tpu.memory_space<vmem>>, vector<8x128xf32>
    tpu.vector_store %arg5[%c0_9, %c0_10], %10 {strides = array<i32>} : memref<8x128xf32, #tpu.memory_space<vmem>>, vector<8x128xf32>,
    return
  }
  func.func @transform_0(%arg0: i32) -> (i32, i32) {
    %c0_i32 = arith.constant 0 : i32
    %c0_i32_0 = arith.constant 0 : i32
    return %arg0, %c0_i32 : i32, i32
  }
  func.func @transform_1(%arg0: i32) -> (i32, i32) {
    %c0_i32 = arith.constant 0 : i32
    %c0_i32_0 = arith.constant 0 : i32
    %c0_i32_1 = arith.constant 0 : i32
    return %c0_i32, %c0_i32_0 : i32, i32
  }
  func.func @transform_2(%arg0: i32) -> (i32, i32) {
    %c0_i32 = arith.constant 0 : i32
    %c0_i32_0 = arith.constant 0 : i32
    %c0_i32_1 = arith.constant 0 : i32
    return %c0_i32, %c0_i32_0 : i32, i32
  }
  func.func @transform_3(%arg0: i32) -> (i32, i32) {
    %c0_i32 = arith.constant 0 : i32
    %c0_i32_0 = arith.constant 0 : i32
    %c0_i32_1 = arith.constant 0 : i32
    return %c0_i32, %c0_i32_0 : i32, i32
  }
  func.func @transform_4(%arg0: i32) -> (i32, i32) {
    %c0_i32 = arith.constant 0 : i32
    %c0_i32_0 = arith.constant 0 : i32
    return %arg0, %c0_i32 : i32, i32
  }
}

</mosaic_0001>

<llo_original>
// kernel: tpu_custom_call.1
$region0: #{tpu_custom_call.1}
  #allocation0 [shape = 'u32[]', space=smem, size = 0x4, offset = 0x4, fixed_abs, tag = 'smem constant byte address 0x4 - core index']
  #allocation1 [shape = 'u32[144,128]{1,0:T(1,128)}', space=vmem, size = 0x12000, scoped, tag = 'internal scratch']
  %s0 = inlined_call_operand.hbm [shape: bf16[8,36], index: 0, kind: input, shape index: {}]
  %s1 = inlined_call_operand.hbm [shape: bf16[36,128], index: 1, kind: input, shape index: {}]
  %s2 = inlined_call_operand.vmem [shape: f32[1,128], index: 2, kind: input, shape index: {}]
  %s3 = inlined_call_operand.hbm [shape: bf16[128,128], index: 3, kind: input, shape index: {}]
  %s4 = inlined_call_operand.hbm [shape: f32[8,128], index: 4, kind: output, shape index: {}]
  %s5 = sld [smem:[#allocation0]]
  $region38: #{tpu_custom_call.1} parent=0
    _
  %s7 = ssub.s32 1, %s5
  %s8 = scalar_select 0, %s7, %s5
  $region1: #{tpu_custom_call.1} parent=0
    #allocation2 [shape = 'u8[2048]{0}', space=vmem, size = 0x800, scoped, tag = 'input window, operand 0, single buffered']
    #allocation3 [shape = 's32[1]{0}', space=sflag, size = 0x4, scoped, tag = 'scoped memory for tpu_custom_call.1']
    #allocation4 [shape = 's32[1]{0}', space=sflag, size = 0x4, scoped, tag = 'scoped memory for tpu_custom_call.1']
    #allocation5 [shape = 'u8[10240]{0}', space=vmem, size = 0x2800, scoped, tag = 'input window, operand 1, single buffered']
    #allocation6 [shape = 's32[1]{0}', space=sflag, size = 0x4, scoped, tag = 'scoped memory for tpu_custom_call.1']
    #allocation7 [shape = 'u8[32768]{0}', space=vmem, size = 0x8000, scoped, tag = 'input window, operand 3, single buffered']
    #allocation8 [shape = 'u8[4096]{0}', space=vmem, size = 0x1000, scoped, tag = 'output window, operand 0, single buffered']
    %9 = vsyncpa [#allocation3], 0
    %10 = vsyncpa [#allocation6], 0
    %11 = vsyncpa [#allocation4], 0
    // Predicated region
    $region2: #{tpu_custom_call.1} parent=1 // pred_check
      _
    $region3: #{tpu_custom_call.1} parent=1 // pred_check_branch
      %13 = sbr.rel (0) target = $region5
    $region4: #{tpu_custom_call.1} parent=1 // pred_region
      %s15 = ssub.s32 64, 64
      %16 = vsyncadd [#allocation3], %s15
      %s18 = sshll.u32 [#allocation2], 4
      %s19 = int_to_ptr.vmem [resolvable:$true] %s18
      %21 = dma.hbm_to_vmem [thread:$0]  %s0, 64, %s19, [#allocation3]
    $region5: #{tpu_custom_call.1} parent=1 // pred_fallthru
      _
    // Predicated region
    $region6: #{tpu_custom_call.1} parent=1 // pred_check
      _
    $region7: #{tpu_custom_call.1} parent=1 // pred_check_branch
      %23 = sbr.rel (0) target = $region9
    $region8: #{tpu_custom_call.1} parent=1 // pred_region
      %s25 = ssub.s32 320, 320
      %26 = vsyncadd [#allocation6], %s25
      %s27 = sshll.u32 [#allocation5], 4
      %s28 = int_to_ptr.vmem [resolvable:$true] %s27
      %33 = dma.hbm_to_vmem [thread:$0]  %s1, 320, %s28, [#allocation6], 64, 64, 4
    $region9: #{tpu_custom_call.1} parent=1 // pred_fallthru
      _
    // Predicated region
    $region10: #{tpu_custom_call.1} parent=1 // pred_check
      _
    $region11: #{tpu_custom_call.1} parent=1 // pred_check_branch
      %35 = sbr.rel (0) target = $region13
    $region12: #{tpu_custom_call.1} parent=1 // pred_region
      _
    $region13: #{tpu_custom_call.1} parent=1 // pred_fallthru
      _
    // Predicated region
    $region14: #{tpu_custom_call.1} parent=1 // pred_check
      _
    $region15: #{tpu_custom_call.1} parent=1 // pred_check_branch
      %37 = sbr.rel (0) target = $region17
    $region16: #{tpu_custom_call.1} parent=1 // pred_region
      %s39 = ssub.s32 1024, 1024
      %40 = vsyncadd [#allocation6], %s39
      %s41 = sshll.u32 [#allocation7], 4
      %s42 = int_to_ptr.vmem [resolvable:$true] %s41
      %47 = dma.hbm_to_vmem [thread:$0]  %s3, 1024, %s42, [#allocation6], 64, 64, 4
    $region17: #{tpu_custom_call.1} parent=1 // pred_fallthru
      _
    // Predicated region
    $region18: #{tpu_custom_call.1} parent=1 // pred_check
      _
    $region19: #{tpu_custom_call.1} parent=1 // pred_check_branch
      %49 = sbr.rel (0) target = $region21
    $region20: #{tpu_custom_call.1} parent=1 // pred_region
      %50 = dma.done [#allocation3], 64
    $region21: #{tpu_custom_call.1} parent=1 // pred_fallthru
      _
    // Predicated region
    $region22: #{tpu_custom_call.1} parent=1 // pred_check
      _
    $region23: #{tpu_custom_call.1} parent=1 // pred_check_branch
      %52 = sbr.rel (0) target = $region25
    $region24: #{tpu_custom_call.1} parent=1 // pred_region
      %53 = dma.done [#allocation6], 320
    $region25: #{tpu_custom_call.1} parent=1 // pred_fallthru
      _
    // Predicated region
    $region26: #{tpu_custom_call.1} parent=1 // pred_check
      _
    $region27: #{tpu_custom_call.1} parent=1 // pred_check_branch
      %55 = sbr.rel (0) target = $region29
    $region28: #{tpu_custom_call.1} parent=1 // pred_region
      %56 = dma.done [#allocation6], 1024
    $region29: #{tpu_custom_call.1} parent=1 // pred_fallthru
      _
    %v58 = vld [vmem:[#allocation2] sm:$0xf]
    %v59 = vld [vmem:[#allocation5] sm:$0xf]
    %v60 = vld [vmem:[#allocation5 + $0x4] sm:$0xf]
    %v61 = vld [vmem:[#allocation5 + $0x8] sm:$0xf]
    %v62 = vld [vmem:[#allocation5 + $0xc] sm:$0xf]
    %v63 = vld [vmem:[#allocation5 + $0x10] sm:$0x3]
    %v64 = vld [vmem:[%s2] sm:$0x1]
    %v66 = vlaneseq
    %v67 = vshrl.u32 %v66, 7
    %v68 = vsub.s32 0, %v67
    %v69 = vrot.slane %v64, %v68
    %v76 = vunpack.c.l.b16 %v59
    %v77 = vunpack.c.l.b16 %v60
    %v78 = vunpack.c.l.b16 %v61
    %v79 = vunpack.c.l.b16 %v62
    %v80 = vunpack.c.l.b16 %v63
    %v81 = vpack.c.b16 %v77, %v76
    %v82 = vpack.c.b16 %v79, %v78
    %v83 = vpack.c.b16 %v80, %v80
    %vm86 = vcmask 293888
    %v88 = vsel %vm86, %v58, 0
    %vm90 = vcmask 1041408
    %v92 = vsel %vm90, %v83, 0
    %94 = vmatprep.subr.bf16.mxu0 0
    %95 = vmatpush1.bf16.msra.mxu0 %v81
    %96 = vmatprep.subr.bf16.mxu0 0
    %97 = vmatpush1.bf16.msra.mxu0 %v82
    %98 = vmatprep.subr.bf16.mxu0 0
    %99 = vmatpush1.bf16.msra.mxu0 %v92
    %100 = vmatprep.subr.bf16.mxu0 0
    %101 = vmatpush1.bf16.msra.mxu0 0
    %102 = vmatprep.subr.bf16.mxu0 0
    %103 = vmatpush1.bf16.msra.mxu0 0
    %104 = vmatprep.subr.bf16.mxu0 0
    %105 = vmatpush1.bf16.msra.mxu0 0
    %106 = vmatprep.subr.bf16.mxu0 0
    %107 = vmatpush1.bf16.msra.mxu0 0
    %108 = vmatprep.subr.bf16.mxu0 0
    %109 = vmatpush1.bf16.msra.mxu0 0
    %110 = vmatprep.subr.bf16.mxu0 0
    %111 = vmatpush1.bf16.msra.mxu0 0
    %112 = vmatprep.subr.bf16.mxu0 0
    %113 = vmatpush1.bf16.msra.mxu0 0
    %114 = vmatprep.subr.bf16.mxu0 0
    %115 = vmatpush1.bf16.msra.mxu0 0
    %116 = vmatprep.subr.bf16.mxu0 0
    %117 = vmatpush1.bf16.msra.mxu0 0
    %118 = vmatprep.subr.bf16.mxu0 0
    %119 = vmatpush1.bf16.msra.mxu0 0
    %120 = vmatprep.subr.bf16.mxu0 0
    %121 = vmatpush1.bf16.msra.mxu0 0
    %122 = vmatprep.subr.bf16.mxu0 0
    %123 = vmatpush1.bf16.msra.mxu0 0
    %124 = vmatprep.subr.bf16.mxu0 0
    %125 = vmatpush1.bf16.msra.mxu0 0
    %126 = vmatprep.mubr.bf16.mxu0 0
    %127 = vmatmul.mubr.bf16.gmra.mrb[0].mxu0 %v88
    %v128 = vpop.f32.mrb[0].mxu0
    %v129 = vadd.f32 %v69, %v128
    %v130 = vpop.f32.mrb[0].mxu0
    %v131 = vpop.f32.mrb[0].mxu0
    %v132 = vpop.f32.mrb[0].mxu0
    %133 = vdwg.mxu0
    %v134 = vmax.f32 %v129, 0.0
    %v135 = vpack.c.bf16 %v134, %v134
    %v136 = vld [vmem:[#allocation7] sm:$0xf]
    %v137 = vld [vmem:[#allocation7 + $0x4] sm:$0xf]
    %v138 = vld [vmem:[#allocation7 + $0x8] sm:$0xf]
    %v139 = vld [vmem:[#allocation7 + $0xc] sm:$0xf]
    %v140 = vld [vmem:[#allocation7 + $0x10] sm:$0xf]
    %v141 = vld [vmem:[#allocation7 + $0x14] sm:$0xf]
    %v142 = vld [vmem:[#allocation7 + $0x18] sm:$0xf]
    %v143 = vld [vmem:[#allocation7 + $0x1c] sm:$0xf]
    %v144 = vld [vmem:[#allocation7 + $0x20] sm:$0xf]
    %v145 = vld [vmem:[#allocation7 + $0x24] sm:$0xf]
    %v146 = vld [vmem:[#allocation7 + $0x28] sm:$0xf]
    %v147 = vld [vmem:[#allocation7 + $0x2c] sm:$0xf]
    %v148 = vld [vmem:[#allocation7 + $0x30] sm:$0xf]
    %v149 = vld [vmem:[#allocation7 + $0x34] sm:$0xf]
    %v150 = vld [vmem:[#allocation7 + $0x38] sm:$0xf]
    %v151 = vld [vmem:[#allocation7 + $0x3c] sm:$0xf]
    %v168 = vunpack.c.l.b16 %v136
    %v169 = vunpack.c.l.b16 %v137
    %v170 = vunpack.c.l.b16 %v138
    %v171 = vunpack.c.l.b16 %v139
    %v172 = vunpack.c.l.b16 %v140
    %v173 = vunpack.c.l.b16 %v141
    %v174 = vunpack.c.l.b16 %v142
    %v175 = vunpack.c.l.b16 %v143
    %v176 = vunpack.c.l.b16 %v144
    %v177 = vunpack.c.l.b16 %v145
    %v178 = vunpack.c.l.b16 %v146
    %v179 = vunpack.c.l.b16 %v147
    %v180 = vunpack.c.l.b16 %v148
    %v181 = vunpack.c.l.b16 %v149
    %v182 = vunpack.c.l.b16 %v150
    %v183 = vunpack.c.l.b16 %v151
    %v184 = vpack.c.b16 %v169, %v168
    %v185 = vpack.c.b16 %v171, %v170
    %v186 = vpack.c.b16 %v173, %v172
    %v187 = vpack.c.b16 %v175, %v174
    %v188 = vpack.c.b16 %v177, %v176
    %v189 = vpack.c.b16 %v179, %v178
    %v190 = vpack.c.b16 %v181, %v180
    %v191 = vpack.c.b16 %v183, %v182
    %200 = vmatprep.subr.bf16.mxu0 0
    %201 = vmatpush1.bf16.msra.mxu0 %v184
    %202 = vmatprep.subr.bf16.mxu0 0
    %203 = vmatpush1.bf16.msra.mxu0 %v185
    %204 = vmatprep.subr.bf16.mxu0 0
    %205 = vmatpush1.bf16.msra.mxu0 %v186
    %206 = vmatprep.subr.bf16.mxu0 0
    %207 = vmatpush1.bf16.msra.mxu0 %v187
    %208 = vmatprep.subr.bf16.mxu0 0
    %209 = vmatpush1.bf16.msra.mxu0 %v188
    %210 = vmatprep.subr.bf16.mxu0 0
    %211 = vmatpush1.bf16.msra.mxu0 %v189
    %212 = vmatprep.subr.bf16.mxu0 0
    %213 = vmatpush1.bf16.msra.mxu0 %v190
    %214 = vmatprep.subr.bf16.mxu0 0
    %215 = vmatpush1.bf16.msra.mxu0 %v191
    %216 = vmatprep.subr.bf16.mxu0 0
    %217 = vmatpush1.bf16.msra.mxu0 0
    %218 = vmatprep.subr.bf16.mxu0 0
    %219 = vmatpush1.bf16.msra.mxu0 0
    %220 = vmatprep.subr.bf16.mxu0 0
    %221 = vmatpush1.bf16.msra.mxu0 0
    %222 = vmatprep.subr.bf16.mxu0 0
    %223 = vmatpush1.bf16.msra.mxu0 0
    %224 = vmatprep.subr.bf16.mxu0 0
    %225 = vmatpush1.bf16.msra.mxu0 0
    %226 = vmatprep.subr.bf16.mxu0 0
    %227 = vmatpush1.bf16.msra.mxu0 0
    %228 = vmatprep.subr.bf16.mxu0 0
    %229 = vmatpush1.bf16.msra.mxu0 0
    %230 = vmatprep.subr.bf16.mxu0 0
    %231 = vmatpush1.bf16.msra.mxu0 0
    %232 = vmatprep.mubr.bf16.mxu0 0
    %233 = vmatmul.mubr.bf16.gmra.mrb[0].mxu0 %v135
    %v234 = vpop.f32.mrb[0].mxu0
    %v235 = vadd.f32 0.0, %v234
    %v236 = vpop.f32.mrb[0].mxu0
    %v237 = vpop.f32.mrb[0].mxu0
    %v238 = vpop.f32.mrb[0].mxu0
    %239 = vdwg.mxu0
    %240 = vst [vmem:[#allocation8] sm:$0xff] %v235
    // Predicated region
    $region30: #{tpu_custom_call.1} parent=1 // pred_check
      _
    $region31: #{tpu_custom_call.1} parent=1 // pred_check_branch
      %242 = sbr.rel (0) target = $region33
    $region32: #{tpu_custom_call.1} parent=1 // pred_region
      %s244 = ssub.s32 128, 128
      %245 = vsyncadd [#allocation4], %s244
      %s247 = sshll.u32 [#allocation8], 4
      %s248 = int_to_ptr.vmem [resolvable:$true] %s247
      %250 = dma.vmem_to_hbm [thread:$0]  %s248, 128, %s4, [#allocation4]
    $region33: #{tpu_custom_call.1} parent=1 // pred_fallthru
      _
    // Predicated region
    $region34: #{tpu_custom_call.1} parent=1 // pred_check
      _
    $region35: #{tpu_custom_call.1} parent=1 // pred_check_branch
      %252 = sbr.rel (0) target = $region37
    $region36: #{tpu_custom_call.1} parent=1 // pred_region
      %253 = dma.done [#allocation4], 128
    $region37: #{tpu_custom_call.1} parent=1 // pred_fallthru
      _
    %254 = vsyncpa [#allocation3], 1
    %255 = vsyncpa [#allocation6], 1
    %256 = vsyncpa [#allocation4], 1

</llo_original>
